<compile_context>
chip_gen: v5e
topology: v5e:2x2
jax: 0.10.0
libtpu: 0.0.40
codegen_flags: <defaults>
</compile_context>

<pallas_src>
import jax
import jax.numpy as jnp
from jax.experimental import pallas as pl
from jax.experimental.pallas import tpu as pltpu

IN_FEATURES = 10
OUT_FEATURES = 2
_TB_MAX = 2048  # batch-tile rows: multiple of 8 (sublane) and VMEM-friendly


def linear_kernel(x_ref, w_ref, b_ref, o_ref):
    # x_ref: [TB, IN], w_ref: [IN, OUT], b_ref: [1, OUT], o_ref: [TB, OUT]
    acc = jnp.dot(x_ref[...], w_ref[...], preferred_element_type=jnp.float32)
    o_ref[...] = (acc + b_ref[...].astype(jnp.float32)).astype(o_ref.dtype)


def linear_pallas(x, w_t, b):
    """y = x @ w_t + b  (== torch nn.Linear with weight = w_t.T, bias = b)."""
    B, K = x.shape
    Kw, N = w_t.shape
    assert K == Kw, (K, Kw)
    b2d = b.reshape(1, N)

    # Batch tile: either the full batch (full-extent blocks are exempt from
    # the (8,128) rule) or a large multiple-of-8 tile for big batches.
    tb = B if B <= _TB_MAX else _TB_MAX
    grid = (pl.cdiv(B, tb),)

    return pl.pallas_call(
        linear_kernel,
        out_shape=jax.ShapeDtypeStruct((B, N), x.dtype),
        grid=grid,
        in_specs=[
            pl.BlockSpec((tb, K), lambda i: (i, 0)),  # x: tiled over batch
            pl.BlockSpec((K, N), lambda i: (0, 0)),   # w_t: replicated
            pl.BlockSpec((1, N), lambda i: (0, 0)),   # bias: replicated
        ],
        out_specs=pl.BlockSpec((tb, N), lambda i: (i, 0)),
        compiler_params=pltpu.CompilerParams(
            # Batch tiles are independent -> shard across TCs on v7x.
            dimension_semantics=("parallel",),
        ),
    )(x, w_t, b2d)


if __name__ == "__main__":
    key = jax.random.PRNGKey(0)
    kx, kw, kb = jax.random.split(key, 3)

    batch = 8
    x = jax.random.normal(kx, (batch, IN_FEATURES), dtype=jnp.float32)

    # Deterministic params mimicking torch Linear init: U(-1/sqrt(fan_in), +).
    bound = 1.0 / (IN_FEATURES ** 0.5)
    weight = jax.random.uniform(
        kw, (OUT_FEATURES, IN_FEATURES), dtype=jnp.float32,
        minval=-bound, maxval=bound,
    )  # torch layout [out, in]
    bias = jax.random.uniform(
        kb, (OUT_FEATURES,), dtype=jnp.float32, minval=-bound, maxval=bound
    )

    w_t = weight.T  # [IN, OUT] for the kernel

    y = linear_pallas(x, w_t, bias)
    y = jax.block_until_ready(y)

    # Reference check (same math as torch's self.fc(x)).
    y_ref = x @ w_t + bias
    assert y.shape == (batch, OUT_FEATURES)
    assert jnp.allclose(y, y_ref, atol=1e-5, rtol=1e-5)

    print("KERNEL_OK")
</pallas_src>

<mosaic_0001>
module attributes {stable_mosaic.version = 11 : i64} {
  func.func @linear_kernel(%arg0: i32, %arg1: memref<8x10xf32, #tpu.memory_space<vmem>>, %arg2: memref<10x2xf32, #tpu.memory_space<vmem>>, %arg3: memref<1x2xf32, #tpu.memory_space<vmem>>, %arg4: memref<8x2xf32, #tpu.memory_space<vmem>>) attributes {dimension_semantics = [#tpu.dimension_semantics<parallel>], iteration_bounds = array<i64: 1>, scalar_prefetch = 0 : i64, scratch_operands = 0 : i64, tpu.core_type = #tpu.core_type<tc>, window_params = [{transform_indices = @transform_0, window_bounds = array<i64: 8, 10>}, {pipeline_mode = #tpu.pipeline_mode<synchronous>, transform_indices = @transform_1, window_bounds = array<i64: 10, 2>}, {pipeline_mode = #tpu.pipeline_mode<synchronous>, transform_indices = @transform_2, window_bounds = array<i64: 1, 2>}, {transform_indices = @transform_3, window_bounds = array<i64: 8, 2>}]} {
    %c0 = arith.constant 0 : index
    %c0_0 = arith.constant 0 : index
    %0 = vector.load %arg1[%c0, %c0_0] : memref<8x10xf32, #tpu.memory_space<vmem>>, vector<8x10xf32>
    %c0_1 = arith.constant 0 : index
    %c0_2 = arith.constant 0 : index
    %1 = vector.load %arg2[%c0_1, %c0_2] : memref<10x2xf32, #tpu.memory_space<vmem>>, vector<10x2xf32>
    %cst = arith.constant dense<0.000000e+00> : vector<8x2xf32>
    %2 = tpu.matmul %0, %1, %cst {dimension_numbers = #tpu.dot_dimension_numbers<[1], [0], [0], [1], [0, 0, 1, 1], [], []>} : vector<8x10xf32>, vector<10x2xf32>, vector<8x2xf32> -> vector<8x2xf32>
    %c0_3 = arith.constant 0 : index
    %c0_4 = arith.constant 0 : index
    %3 = vector.load %arg3[%c0_3, %c0_4] : memref<1x2xf32, #tpu.memory_space<vmem>>, vector<1x2xf32>
    %4 = vector.broadcast %3 : vector<1x2xf32> to vector<8x2xf32>
    %5 = arith.addf %2, %4 : vector<8x2xf32>
    %c0_5 = arith.constant 0 : index
    %c0_6 = arith.constant 0 : index
    %6 = vector.load %arg4[%c0_5, %c0_6] : memref<8x2xf32, #tpu.memory_space<vmem>>, vector<8x2xf32>
    tpu.vector_store %arg4[%c0_5, %c0_6], %5 {strides = array<i32>} : memref<8x2xf32, #tpu.memory_space<vmem>>, vector<8x2xf32>,
    return
  }
  func.func @transform_0(%arg0: i32) -> (i32, i32) {
    %c0_i32 = arith.constant 0 : i32
    %c0_i32_0 = arith.constant 0 : i32
    return %arg0, %c0_i32 : i32, i32
  }
  func.func @transform_1(%arg0: i32) -> (i32, i32) {
    %c0_i32 = arith.constant 0 : i32
    %c0_i32_0 = arith.constant 0 : i32
    %c0_i32_1 = arith.constant 0 : i32
    return %c0_i32, %c0_i32_0 : i32, i32
  }
  func.func @transform_2(%arg0: i32) -> (i32, i32) {
    %c0_i32 = arith.constant 0 : i32
    %c0_i32_0 = arith.constant 0 : i32
    %c0_i32_1 = arith.constant 0 : i32
    return %c0_i32, %c0_i32_0 : i32, i32
  }
  func.func @transform_3(%arg0: i32) -> (i32, i32) {
    %c0_i32 = arith.constant 0 : i32
    %c0_i32_0 = arith.constant 0 : i32
    return %arg0, %c0_i32 : i32, i32
  }
}

</mosaic_0001>

<llo_original>
// kernel: tpu_custom_call.1
$region0: #{tpu_custom_call.1}
  #allocation0 [shape = 'u32[]', space=smem, size = 0x4, offset = 0x4, fixed_abs, tag = 'smem constant byte address 0x4 - core index']
  #allocation1 [shape = 'u32[72,128]{1,0:T(1,128)}', space=vmem, size = 0x9000, scoped, tag = 'internal scratch']
  %s0 = inlined_call_operand.vmem [shape: f32[8,10], index: 0, kind: input, shape index: {}]
  %s1 = inlined_call_operand.vmem [shape: f32[10,2], index: 1, kind: input, shape index: {}]
  %s2 = inlined_call_operand.vmem [shape: f32[1,2], index: 2, kind: input, shape index: {}]
  %s3 = inlined_call_operand.vmem [shape: f32[8,2], index: 3, kind: output, shape index: {}]
  %s4 = sld [smem:[#allocation0]]
  $region22: #{tpu_custom_call.1} parent=0
    _
  %s6 = ssub.s32 1, %s4
  %s7 = scalar_select 0, %s6, %s4
  // Predicated region
  $region2: #{tpu_custom_call.1} parent=0 // pred_check
    _
  $region3: #{tpu_custom_call.1} parent=0 // pred_check_branch
    %9 = sbr.rel (0) target = $region5
  $region4: #{tpu_custom_call.1} parent=0 // pred_region
    _
  $region5: #{tpu_custom_call.1} parent=0 // pred_fallthru
    _
  // Predicated region
  $region6: #{tpu_custom_call.1} parent=0 // pred_check
    _
  $region7: #{tpu_custom_call.1} parent=0 // pred_check_branch
    %11 = sbr.rel (0) target = $region9
  $region8: #{tpu_custom_call.1} parent=0 // pred_region
    _
  $region9: #{tpu_custom_call.1} parent=0 // pred_fallthru
    _
  // Predicated region
  $region10: #{tpu_custom_call.1} parent=0 // pred_check
    _
  $region11: #{tpu_custom_call.1} parent=0 // pred_check_branch
    %13 = sbr.rel (0) target = $region13
  $region12: #{tpu_custom_call.1} parent=0 // pred_region
    _
  $region13: #{tpu_custom_call.1} parent=0 // pred_fallthru
    _
  %v14 = vld [vmem:[%s0] sm:$0xff]
  %v15 = vld [vmem:[%s1] sm:$0xff]
  %v16 = vld [vmem:[%s1 + $0x8] sm:$0x3]
  %v17 = vld [vmem:[%s2] sm:$0x1]
  %v19 = vperm.slane %v17, 0
  %vm21 = vcmask 80896
  %v23 = vsel %vm21, %v14, 0
  %vm25 = vcmask 1041408
  %v27 = vsel %vm25, %v16, 0
  %29 = vmatpush.msra.mxu0 0.0
  %30 = vmatpush.msra.mxu0 0.0
  %31 = vmatpush.msra.mxu0 0.0
  %32 = vmatpush.msra.mxu0 0.0
  %33 = vmatpush.msra.mxu0 0.0
  %34 = vmatpush.msra.mxu0 0.0
  %35 = vmatpush.msra.mxu0 0.0
  %36 = vmatpush.msra.mxu0 0.0
  %37 = vmatpush.msra.mxu0 0.0
  %38 = vmatpush.msra.mxu0 0.0
  %39 = vmatpush.msra.mxu0 0.0
  %40 = vmatpush.msra.mxu0 0.0
  %41 = vmatpush.msra.mxu0 0.0
  %42 = vmatpush.msra.mxu0 0.0
  %43 = vmatpush.msra.mxu0 %v27
  %44 = vmatpush.msra.mxu0 %v15
  %45 = vmatmul.f32.gmra.mxu0 %v23
  %v46 = vpop.f32.mrf.mxu0
  %v47 = vadd.f32 %v19, %v46
  %48 = vdwg.mxu0
  %vm49 = vcmask 15360
  %50 = vst.msk [vmem:[%s3] sm:$0xff] %vm49, %v47
  // Predicated region
  $region14: #{tpu_custom_call.1} parent=0 // pred_check
    _
  $region15: #{tpu_custom_call.1} parent=0 // pred_check_branch
    %52 = sbr.rel (0) target = $region17
  $region16: #{tpu_custom_call.1} parent=0 // pred_region
    _
  $region17: #{tpu_custom_call.1} parent=0 // pred_fallthru
    _
  // Predicated region
  $region18: #{tpu_custom_call.1} parent=0 // pred_check
    _
  $region19: #{tpu_custom_call.1} parent=0 // pred_check_branch
    %54 = sbr.rel (0) target = $region21
  $region20: #{tpu_custom_call.1} parent=0 // pred_region
    _
  $region21: #{tpu_custom_call.1} parent=0 // pred_fallthru
    _

</llo_original>
